<compile_context>
chip_gen: v7x
topology: tpu7x:2x2x1
jax: 0.10.0
libtpu: 0.0.40
codegen_flags: <defaults>
</compile_context>

<pallas_src>
import functools

import jax
import jax.numpy as jnp
from jax import lax
from jax.experimental import pallas as pl
from jax.experimental.pallas import tpu as pltpu


# ----------------------------- generation probes -----------------------------
def _device_kind():
    try:
        return jax.devices()[0].device_kind.lower()
    except Exception:
        return ""


def _tensorcores_per_chip():
    kind = _device_kind()
    # v7x exposes 2 TensorCores per chip; v4/v5e/v6e behave as 1 per device.
    return 2 if ("v7" in kind or "7x" in kind) else 1


def _bf16_epilogue_default():
    kind = _device_kind()
    # v6e / v7x have packed-bf16 VALUs; v5e does not (no win, keep f32 there).
    return ("v6" in kind) or ("v7" in kind) or ("7x" in kind)


def _pick_tile_b(B, n_tc):
    """Lane-axis batch tile.
       * multi-TC chips (v7x): even number of grid steps >= 2 so both TCs work,
       * single-TC chips (v5e/v6e): one fat step up to 4096 (amortizes the
         ~0.35 us/step overhead and MXU weight re-staging)."""
    if B % 128 != 0:
        # Lane-masked fallback, single step. Pad B to a multiple of 128 for
        # predictable performance.
        return B
    max_tile = 4096  # ~0.8 KB VMEM per batch element -> ~3.3 MB per tile
    if n_tc >= 2 and B >= 256:
        t = min(max_tile, B // 2)
        t = (t // 128) * 128
        while t >= 128:
            if B % t == 0 and (B // t) % 2 == 0:
                return t
            t -= 128
        return 128
    if B <= max_tile:
        return B
    t = max_tile
    while t >= 128:
        if B % t == 0:
            return t
        t -= 128
    return B


# --------------------------------- kernel ------------------------------------
def mlp_kernel(x_ref, w1_ref, b1_ref, w2_ref, b2_ref, w3_ref, b3_ref, o_ref,
               *, bf16_epilogue):
    # x_ref: [tile_b, in_dim] f32 — read straight from HBM, cast in-kernel.
    x_bf = x_ref[...].astype(jnp.bfloat16)

    # Layer 1 (MXU): contract in_dim of w1 [hidden, in_dim] with in_dim of x
    # -> [hidden, tile_b], f32 accumulation. Batch stays on the lane axis.
    h = lax.dot_general(w1_ref[...], x_bf,
                        dimension_numbers=(((1,), (1,)), ((), ())),
                        preferred_element_type=jnp.float32)
    if bf16_epilogue:
        # v6e/v7x packed-bf16 VALU: cast first, bias + ReLU in bf16.
        h = jnp.maximum(h.astype(jnp.bfloat16) + b1_ref[...].astype(jnp.bfloat16), 0)
    else:
        h = jnp.maximum(h + b1_ref[...], 0.0).astype(jnp.bfloat16)

    # Layer 2 (MXU): [hidden, hidden] bf16 @ [hidden, tile_b] bf16 -> f32.
    h = jnp.dot(w2_ref[...], h, preferred_element_type=jnp.float32)
    h = jnp.maximum(h + b2_ref[...], 0.0)

    # Layer 3 (output_dim == 1): VPU multiply + XLU cross-sublane reduce.
    # Result [1, tile_b] is lane-dense -> unmasked full-width stores.
    y = jnp.sum(h * w3_ref[...], axis=0, keepdims=True) + b3_ref[...]
    o_ref[...] = jnp.maximum(y, 0.0).astype(o_ref.dtype)


# -------------------------------- wrapper -------------------------------------
@functools.partial(jax.jit, static_argnames=("tile_b", "bf16_epilogue"))
def _mlp_forward_impl(x, params, *, tile_b, bf16_epilogue):
    B, in_dim = x.shape
    hidden = params["w1"].shape[0]
    out_dim = params["w3"].shape[1]
    assert B % tile_b == 0, "batch must be divisible by tile_b"
    grid = (B // tile_b,)

    # Constant index maps: weights/biases are staged once; default Buffered(2)
    # double-buffering costs <150 KB of VMEM at these sizes, so keep defaults.
    const = lambda shape: pl.BlockSpec(shape, lambda i: (0, 0))
    kernel = functools.partial(mlp_kernel, bf16_epilogue=bf16_epilogue)

    out_t = pl.pallas_call(
        kernel,
        out_shape=jax.ShapeDtypeStruct((out_dim, B), jnp.float32),
        grid_spec=pltpu.PrefetchScalarGridSpec(
            num_scalar_prefetch=0,
            grid=grid,
            in_specs=[
                pl.BlockSpec((tile_b, in_dim), lambda i: (i, 0)),  # x, untransposed
                const((hidden, in_dim)),    # w1 (PyTorch (out, in) layout, bf16)
                const((hidden, 1)),         # b1 (f32)
                const((hidden, hidden)),    # w2 (bf16)
                const((hidden, 1)),         # b2 (f32)
                const((hidden, out_dim)),   # w3 column (f32, VPU path)
                const((out_dim, 1)),        # b3 (f32)
            ],
            out_specs=pl.BlockSpec((out_dim, tile_b), lambda i: (0, i)),
        ),
        compiler_params=pltpu.CompilerParams(
            dimension_semantics=("parallel",)),   # batch tiles shard across TCs
    )(x, params["w1"], params["b1"], params["w2"], params["b2"],
      params["w3"], params["b3"])

    if out_dim == 1:
        # (1, B) and (B, 1) share the same memory order: reshape is free,
        # no XLA relayout pass.
        return out_t.reshape(B, 1)
    return out_t.T


def mlp_forward(x, params, *, tile_b=None, bf16_epilogue=None):
    """x: [B, input_dim] float32. Returns [B, output_dim] float32."""
    if tile_b is None:
        tile_b = _pick_tile_b(x.shape[0], _tensorcores_per_chip())
    if bf16_epilogue is None:
        bf16_epilogue = _bf16_epilogue_default()
    return _mlp_forward_impl(x, params, tile_b=int(tile_b),
                             bf16_epilogue=bool(bf16_epilogue))


# --------------------------------- params -------------------------------------
def init_params(key, input_dim, hidden_dim, output_dim):
    """Deterministic init mimicking nn.Linear default (uniform +-1/sqrt(fan_in)).
    Weights kept in PyTorch (out, in) layout; MXU weights cast to bf16
    (intentional precision choice; accumulation stays f32)."""
    ks = jax.random.split(key, 6)

    def linear(kw, kb, fan_in, fan_out):
        bound = 1.0 / jnp.sqrt(fan_in)
        w = jax.random.uniform(kw, (fan_out, fan_in), jnp.float32, -bound, bound)
        b = jax.random.uniform(kb, (fan_out, 1), jnp.float32, -bound, bound)
        return w, b

    w1, b1 = linear(ks[0], ks[1], input_dim, hidden_dim)
    w2, b2 = linear(ks[2], ks[3], hidden_dim, hidden_dim)
    w3, b3 = linear(ks[4], ks[5], hidden_dim, output_dim)
    return {
        "w1": w1.astype(jnp.bfloat16), "b1": b1,
        "w2": w2.astype(jnp.bfloat16), "b2": b2,
        "w3": w3.T,                      # (hidden, output_dim), f32 (VPU layer)
        "b3": b3,                        # (output_dim, 1)
    }


# ------------------------------- reference ------------------------------------
def ref_forward(x, params, *, bf16_epilogue):
    """Plain-JAX reference mirroring the kernel's bf16 MXU inputs / epilogue."""
    bf16, f32 = jnp.bfloat16, jnp.float32
    xb = x.astype(bf16)
    h = lax.dot_general(xb, params["w1"], (((1,), (1,)), ((), ())),
                        preferred_element_type=f32)          # (B, hidden)
    if bf16_epilogue:
        h = jnp.maximum(h.astype(bf16) + params["b1"].astype(bf16).T, 0)
    else:
        h = jnp.maximum(h + params["b1"].T, 0.0).astype(bf16)
    h = lax.dot_general(h, params["w2"], (((1,), (1,)), ((), ())),
                        preferred_element_type=f32)          # (B, hidden)
    h = jnp.maximum(h + params["b2"].T, 0.0)
    y = jnp.sum(h * params["w3"].T, axis=-1, keepdims=True) + params["b3"].T
    return jnp.maximum(y, 0.0)


# ---------------------------------- main --------------------------------------
if __name__ == "__main__":
    # Model(embedding=...) with embedding_len = 16 -> input_dim = 3*16 = 48,
    # MLP(num_layers=3, hidden_dim=128, output_dim=1).
    embedding_len = 16
    input_dim = 3 * embedding_len
    hidden_dim = 128
    output_dim = 1
    batch = 512

    key = jax.random.PRNGKey(0)
    k_x, k_p = jax.random.split(key)
    x = jax.random.normal(k_x, (batch, input_dim), jnp.float32)
    params = init_params(k_p, input_dim, hidden_dim, output_dim)

    use_bf16_ep = _bf16_epilogue_default()
    out = mlp_forward(x, params, bf16_epilogue=use_bf16_ep)
    out = jax.block_until_ready(out)
    assert out.shape == (batch, output_dim)

    ref = ref_forward(x, params, bf16_epilogue=use_bf16_ep)
    assert jnp.allclose(out, ref, atol=2e-2, rtol=2e-2), (
        float(jnp.max(jnp.abs(out - ref))))

    print("KERNEL_OK")
</pallas_src>

<mosaic_0001>
module attributes {stable_mosaic.version = 11 : i64} {
  func.func @mlp_kernel(%arg0: i32, %arg1: memref<512x48xf32, #tpu.memory_space<vmem>>, %arg2: memref<128x48xbf16, #tpu.memory_space<vmem>>, %arg3: memref<128x1xf32, #tpu.memory_space<vmem>>, %arg4: memref<128x128xbf16, #tpu.memory_space<vmem>>, %arg5: memref<128x1xf32, #tpu.memory_space<vmem>>, %arg6: memref<128x1xf32, #tpu.memory_space<vmem>>, %arg7: memref<1x1xf32, #tpu.memory_space<vmem>>, %arg8: memref<1x512xf32, #tpu.memory_space<vmem>>) attributes {dimension_semantics = [#tpu.dimension_semantics<parallel>], iteration_bounds = array<i64: 1>, scalar_prefetch = 0 : i64, scratch_operands = 0 : i64, tpu.core_type = #tpu.core_type<tc>, window_params = [{transform_indices = @transform_0, window_bounds = array<i64: 512, 48>}, {pipeline_mode = #tpu.pipeline_mode<synchronous>, transform_indices = @transform_1, window_bounds = array<i64: 128, 48>}, {pipeline_mode = #tpu.pipeline_mode<synchronous>, transform_indices = @transform_2, window_bounds = array<i64: 128, 1>}, {pipeline_mode = #tpu.pipeline_mode<synchronous>, transform_indices = @transform_3, window_bounds = array<i64: 128, 128>}, {pipeline_mode = #tpu.pipeline_mode<synchronous>, transform_indices = @transform_4, window_bounds = array<i64: 128, 1>}, {pipeline_mode = #tpu.pipeline_mode<synchronous>, transform_indices = @transform_5, window_bounds = array<i64: 128, 1>}, {pipeline_mode = #tpu.pipeline_mode<synchronous>, transform_indices = @transform_6, window_bounds = array<i64: 1, 1>}, {transform_indices = @transform_7, window_bounds = array<i64: 1, 512>}]} {
    %c0 = arith.constant 0 : index
    %c0_0 = arith.constant 0 : index
    %0 = vector.load %arg1[%c0, %c0_0] : memref<512x48xf32, #tpu.memory_space<vmem>>, vector<512x48xf32>
    %1 = arith.truncf %0 : vector<512x48xf32> to vector<512x48xbf16>
    %c0_1 = arith.constant 0 : index
    %c0_2 = arith.constant 0 : index
    %2 = vector.load %arg2[%c0_1, %c0_2] : memref<128x48xbf16, #tpu.memory_space<vmem>>, vector<128x48xbf16>
    %cst = arith.constant dense<0.000000e+00> : vector<128x512xf32>
    %3 = tpu.matmul %2, %1, %cst {dimension_numbers = #tpu.dot_dimension_numbers<[1], [1], [0], [0], [0, 0, 1, 0], [], []>} : vector<128x48xbf16>, vector<512x48xbf16>, vector<128x512xf32> -> vector<128x512xf32>
    %c0_3 = arith.constant 0 : index
    %c0_4 = arith.constant 0 : index
    %4 = vector.load %arg3[%c0_3, %c0_4] : memref<128x1xf32, #tpu.memory_space<vmem>>, vector<128x1xf32>
    %5 = vector.broadcast %4 : vector<128x1xf32> to vector<128x512xf32>
    %6 = arith.addf %3, %5 : vector<128x512xf32>
    %cst_5 = arith.constant 0.000000e+00 : f32
    %7 = vector.broadcast %cst_5 : f32 to vector<128x512xf32>
    %8 = arith.maximumf %6, %7 : vector<128x512xf32>
    %9 = arith.truncf %8 : vector<128x512xf32> to vector<128x512xbf16>
    %c0_6 = arith.constant 0 : index
    %c0_7 = arith.constant 0 : index
    %10 = vector.load %arg4[%c0_6, %c0_7] : memref<128x128xbf16, #tpu.memory_space<vmem>>, vector<128x128xbf16>
    %cst_8 = arith.constant dense<0.000000e+00> : vector<128x512xf32>
    %11 = tpu.matmul %10, %9, %cst_8 {dimension_numbers = #tpu.dot_dimension_numbers<[1], [0], [0], [1], [0, 0, 1, 1], [], []>} : vector<128x128xbf16>, vector<128x512xbf16>, vector<128x512xf32> -> vector<128x512xf32>
    %c0_9 = arith.constant 0 : index
    %c0_10 = arith.constant 0 : index
    %12 = vector.load %arg5[%c0_9, %c0_10] : memref<128x1xf32, #tpu.memory_space<vmem>>, vector<128x1xf32>
    %13 = vector.broadcast %12 : vector<128x1xf32> to vector<128x512xf32>
    %14 = arith.addf %11, %13 : vector<128x512xf32>
    %cst_11 = arith.constant 0.000000e+00 : f32
    %15 = vector.broadcast %cst_11 : f32 to vector<128x512xf32>
    %16 = arith.maximumf %14, %15 : vector<128x512xf32>
    %c0_12 = arith.constant 0 : index
    %c0_13 = arith.constant 0 : index
    %17 = vector.load %arg6[%c0_12, %c0_13] : memref<128x1xf32, #tpu.memory_space<vmem>>, vector<128x1xf32>
    %18 = vector.broadcast %17 : vector<128x1xf32> to vector<128x512xf32>
    %19 = arith.mulf %16, %18 : vector<128x512xf32>
    %cst_14 = arith.constant dense<0.000000e+00> : vector<512xf32>
    %20 = vector.multi_reduction <add>, %19, %cst_14 [0] : vector<128x512xf32> to vector<512xf32>
    %21 = vector.shape_cast %20 : vector<512xf32> to vector<1x512xf32>
    %c0_15 = arith.constant 0 : index
    %c0_16 = arith.constant 0 : index
    %22 = vector.load %arg7[%c0_15, %c0_16] : memref<1x1xf32, #tpu.memory_space<vmem>>, vector<1x1xf32>
    %23 = vector.broadcast %22 : vector<1x1xf32> to vector<1x512xf32>
    %24 = arith.addf %21, %23 : vector<1x512xf32>
    %cst_17 = arith.constant 0.000000e+00 : f32
    %25 = vector.broadcast %cst_17 : f32 to vector<1x512xf32>
    %26 = arith.maximumf %24, %25 : vector<1x512xf32>
    %c0_18 = arith.constant 0 : index
    %c0_19 = arith.constant 0 : index
    %27 = vector.load %arg8[%c0_18, %c0_19] : memref<1x512xf32, #tpu.memory_space<vmem>>, vector<1x512xf32>
    tpu.vector_store %arg8[%c0_18, %c0_19], %26 {strides = array<i32>} : memref<1x512xf32, #tpu.memory_space<vmem>>, vector<1x512xf32>,
    return
  }
  func.func @transform_0(%arg0: i32) -> (i32, i32) {
    %c0_i32 = arith.constant 0 : i32
    %c0_i32_0 = arith.constant 0 : i32
    return %arg0, %c0_i32 : i32, i32
  }
  func.func @transform_1(%arg0: i32) -> (i32, i32) {
    %c0_i32 = arith.constant 0 : i32
    %c0_i32_0 = arith.constant 0 : i32
    %c0_i32_1 = arith.constant 0 : i32
    return %c0_i32, %c0_i32_0 : i32, i32
  }
  func.func @transform_2(%arg0: i32) -> (i32, i32) {
    %c0_i32 = arith.constant 0 : i32
    %c0_i32_0 = arith.constant 0 : i32
    %c0_i32_1 = arith.constant 0 : i32
    return %c0_i32, %c0_i32_0 : i32, i32
  }
  func.func @transform_3(%arg0: i32) -> (i32, i32) {
    %c0_i32 = arith.constant 0 : i32
    %c0_i32_0 = arith.constant 0 : i32
    %c0_i32_1 = arith.constant 0 : i32
    return %c0_i32, %c0_i32_0 : i32, i32
  }
  func.func @transform_4(%arg0: i32) -> (i32, i32) {
    %c0_i32 = arith.constant 0 : i32
    %c0_i32_0 = arith.constant 0 : i32
    %c0_i32_1 = arith.constant 0 : i32
    return %c0_i32, %c0_i32_0 : i32, i32
  }
  func.func @transform_5(%arg0: i32) -> (i32, i32) {
    %c0_i32 = arith.constant 0 : i32
    %c0_i32_0 = arith.constant 0 : i32
    %c0_i32_1 = arith.constant 0 : i32
    return %c0_i32, %c0_i32_0 : i32, i32
  }
  func.func @transform_6(%arg0: i32) -> (i32, i32) {
    %c0_i32 = arith.constant 0 : i32
    %c0_i32_0 = arith.constant 0 : i32
    %c0_i32_1 = arith.constant 0 : i32
    return %c0_i32, %c0_i32_0 : i32, i32
  }
  func.func @transform_7(%arg0: i32) -> (i32, i32) {
    %c0_i32 = arith.constant 0 : i32
    %c0_i32_0 = arith.constant 0 : i32
    return %c0_i32, %arg0 : i32, i32
  }
}

</mosaic_0001>

<llo_original>
// kernel: _mlp_forward_impl.1
$region0: #{_mlp_forward_impl.1}
  #allocation0 [shape = 'u32[]', space=smem, size = 0x4, offset = 0x4, fixed_abs, tag = 'smem constant byte address 0x4 - core index']
  #allocation1 [shape = 'u32[144,128]{1,0:T(1,128)}', space=vmem, size = 0x12000, scoped, tag = 'internal scratch']
  #allocation2 [shape = 'f32[1,1]{1,0:T(1,128)S(1)}', space=vmem, size = 0x200, scoped, tag = 'scoped memory for _mlp_forward_impl.1']
  %s0 = inlined_call_operand.vmem [shape: f32[512,48], index: 0, kind: input, shape index: {}]
  %s1 = inlined_call_operand.vmem [shape: bf16[128,48], index: 1, kind: input, shape index: {}]
  %s2 = inlined_call_operand.vmem [shape: f32[128,1], index: 2, kind: input, shape index: {}]
  %s3 = inlined_call_operand.vmem [shape: bf16[128,128], index: 3, kind: input, shape index: {}]
  %s4 = inlined_call_operand.vmem [shape: f32[128,1], index: 4, kind: input, shape index: {}]
  %s5 = inlined_call_operand.vmem [shape: f32[128,1], index: 5, kind: input, shape index: {}]
  %s6 = inlined_call_operand.<no memory space> [shape: f32[1,1], index: 6, kind: input, shape index: {}]
  %s7 = inlined_call_operand.hbm [shape: f32[1,512], index: 7, kind: output, shape index: {}]
  %s8 = sld [smem:[#allocation0]]
  $region38: #{_mlp_forward_impl.1} parent=0
    _
  %s10 = ssub.s32 1, %s8
  %s11 = scalar_select 0, %s10, %s8
  %v12 = vstv %s6
  %13 = vst [vmem:[#allocation2] sm:$0x1] %v12
  $region1: #{_mlp_forward_impl.1} parent=0
    #allocation3 [shape = 'u8[2048]{0}', space=vmem, size = 0x800, scoped, tag = 'output window, operand 0, single buffered']
    #allocation4 [shape = 's32[1]{0}', space=sflag, size = 0x4, scoped, tag = 'scoped memory for _mlp_forward_impl.1']
    %14 = vsyncpa [#allocation4], 0
    // Predicated region
    $region2: #{_mlp_forward_impl.1} parent=1 // pred_check
      _
    $region3: #{_mlp_forward_impl.1} parent=1 // pred_check_branch
      %16 = sbr.rel (0) target = $region5
    $region4: #{_mlp_forward_impl.1} parent=1 // pred_region
      _
    $region5: #{_mlp_forward_impl.1} parent=1 // pred_fallthru
      _
    // Predicated region
    $region6: #{_mlp_forward_impl.1} parent=1 // pred_check
      _
    $region7: #{_mlp_forward_impl.1} parent=1 // pred_check_branch
      %18 = sbr.rel (0) target = $region9
    $region8: #{_mlp_forward_impl.1} parent=1 // pred_region
      _
    $region9: #{_mlp_forward_impl.1} parent=1 // pred_fallthru
      _
    // Predicated region
    $region10: #{_mlp_forward_impl.1} parent=1 // pred_check
      _
    $region11: #{_mlp_forward_impl.1} parent=1 // pred_check_branch
      %20 = sbr.rel (0) target = $region13
    $region12: #{_mlp_forward_impl.1} parent=1 // pred_region
      _
    $region13: #{_mlp_forward_impl.1} parent=1 // pred_fallthru
      _
    // Predicated region
    $region14: #{_mlp_forward_impl.1} parent=1 // pred_check
      _
    $region15: #{_mlp_forward_impl.1} parent=1 // pred_check_branch
      %22 = sbr.rel (0) target = $region17
    $region16: #{_mlp_forward_impl.1} parent=1 // pred_region
      _
    $region17: #{_mlp_forward_impl.1} parent=1 // pred_fallthru
      _
    // Predicated region
    $region18: #{_mlp_forward_impl.1} parent=1 // pred_check
      _
    $region19: #{_mlp_forward_impl.1} parent=1 // pred_check_branch
      %24 = sbr.rel (0) target = $region21
    $region20: #{_mlp_forward_impl.1} parent=1 // pred_region
      _
    $region21: #{_mlp_forward_impl.1} parent=1 // pred_fallthru
      _
    // Predicated region
    $region22: #{_mlp_forward_impl.1} parent=1 // pred_check
      _
    $region23: #{_mlp_forward_impl.1} parent=1 // pred_check_branch
      %26 = sbr.rel (0) target = $region25
    $region24: #{_mlp_forward_impl.1} parent=1 // pred_region
      _
    $region25: #{_mlp_forward_impl.1} parent=1 // pred_fallthru
      _
    // Predicated region
    $region26: #{_mlp_forward_impl.1} parent=1 // pred_check
      _
    $region27: #{_mlp_forward_impl.1} parent=1 // pred_check_branch
      %28 = sbr.rel (0) target = $region29
    $region28: #{_mlp_forward_impl.1} parent=1 // pred_region
      _
    $region29: #{_mlp_forward_impl.1} parent=1 // pred_fallthru
      _
    %v30 = vld [vmem:[%s0] sm:$0xff]
    %v31 = vld [vmem:[%s0 + $0x8] sm:$0xff]
    %v32 = vld [vmem:[%s0 + $0x10] sm:$0xff]
    %v33 = vld [vmem:[%s0 + $0x18] sm:$0xff]
    %v34 = vld [vmem:[%s0 + $0x20] sm:$0xff]
    %v35 = vld [vmem:[%s0 + $0x28] sm:$0xff]
    %v36 = vld [vmem:[%s0 + $0x30] sm:$0xff]
    %v37 = vld [vmem:[%s0 + $0x38] sm:$0xff]
    %v38 = vld [vmem:[%s0 + $0x40] sm:$0xff]
    %v39 = vld [vmem:[%s0 + $0x48] sm:$0xff]
    %v40 = vld [vmem:[%s0 + $0x50] sm:$0xff]
    %v41 = vld [vmem:[%s0 + $0x58] sm:$0xff]
    %v42 = vld [vmem:[%s0 + $0x60] sm:$0xff]
    %v43 = vld [vmem:[%s0 + $0x68] sm:$0xff]
    %v44 = vld [vmem:[%s0 + $0x70] sm:$0xff]
    %v45 = vld [vmem:[%s0 + $0x78] sm:$0xff]
    %v46 = vld [vmem:[%s0 + $0x80] sm:$0xff]
    %v47 = vld [vmem:[%s0 + $0x88] sm:$0xff]
    %v48 = vld [vmem:[%s0 + $0x90] sm:$0xff]
    %v49 = vld [vmem:[%s0 + $0x98] sm:$0xff]
    %v50 = vld [vmem:[%s0 + $0xa0] sm:$0xff]
    %v51 = vld [vmem:[%s0 + $0xa8] sm:$0xff]
    %v52 = vld [vmem:[%s0 + $0xb0] sm:$0xff]
    %v53 = vld [vmem:[%s0 + $0xb8] sm:$0xff]
    %v54 = vld [vmem:[%s0 + $0xc0] sm:$0xff]
    %v55 = vld [vmem:[%s0 + $0xc8] sm:$0xff]
    %v56 = vld [vmem:[%s0 + $0xd0] sm:$0xff]
    %v57 = vld [vmem:[%s0 + $0xd8] sm:$0xff]
    %v58 = vld [vmem:[%s0 + $0xe0] sm:$0xff]
    %v59 = vld [vmem:[%s0 + $0xe8] sm:$0xff]
    %v60 = vld [vmem:[%s0 + $0xf0] sm:$0xff]
    %v61 = vld [vmem:[%s0 + $0xf8] sm:$0xff]
    %v62 = vld [vmem:[%s0 + $0x100] sm:$0xff]
    %v63 = vld [vmem:[%s0 + $0x108] sm:$0xff]
    %v64 = vld [vmem:[%s0 + $0x110] sm:$0xff]
    %v65 = vld [vmem:[%s0 + $0x118] sm:$0xff]
    %v66 = vld [vmem:[%s0 + $0x120] sm:$0xff]
    %v67 = vld [vmem:[%s0 + $0x128] sm:$0xff]
    %v68 = vld [vmem:[%s0 + $0x130] sm:$0xff]
    %v69 = vld [vmem:[%s0 + $0x138] sm:$0xff]
    %v70 = vld [vmem:[%s0 + $0x140] sm:$0xff]
    %v71 = vld [vmem:[%s0 + $0x148] sm:$0xff]
    %v72 = vld [vmem:[%s0 + $0x150] sm:$0xff]
    %v73 = vld [vmem:[%s0 + $0x158] sm:$0xff]
    %v74 = vld [vmem:[%s0 + $0x160] sm:$0xff]
    %v75 = vld [vmem:[%s0 + $0x168] sm:$0xff]
    %v76 = vld [vmem:[%s0 + $0x170] sm:$0xff]
    %v77 = vld [vmem:[%s0 + $0x178] sm:$0xff]
    %v78 = vld [vmem:[%s0 + $0x180] sm:$0xff]
    %v79 = vld [vmem:[%s0 + $0x188] sm:$0xff]
    %v80 = vld [vmem:[%s0 + $0x190] sm:$0xff]
    %v81 = vld [vmem:[%s0 + $0x198] sm:$0xff]
    %v82 = vld [vmem:[%s0 + $0x1a0] sm:$0xff]
    %v83 = vld [vmem:[%s0 + $0x1a8] sm:$0xff]
    %v84 = vld [vmem:[%s0 + $0x1b0] sm:$0xff]
    %v85 = vld [vmem:[%s0 + $0x1b8] sm:$0xff]
    %v86 = vld [vmem:[%s0 + $0x1c0] sm:$0xff]
    %v87 = vld [vmem:[%s0 + $0x1c8] sm:$0xff]
    %v88 = vld [vmem:[%s0 + $0x1d0] sm:$0xff]
    %v89 = vld [vmem:[%s0 + $0x1d8] sm:$0xff]
    %v90 = vld [vmem:[%s0 + $0x1e0] sm:$0xff]
    %v91 = vld [vmem:[%s0 + $0x1e8] sm:$0xff]
    %v92 = vld [vmem:[%s0 + $0x1f0] sm:$0xff]
    %v93 = vld [vmem:[%s0 + $0x1f8] sm:$0xff]
    %v94 = vpack.c.bf16 %v31, %v30
    %v95 = vpack.c.bf16 %v33, %v32
    %v96 = vpack.c.bf16 %v35, %v34
    %v97 = vpack.c.bf16 %v37, %v36
    %v98 = vpack.c.bf16 %v39, %v38
    %v99 = vpack.c.bf16 %v41, %v40
    %v100 = vpack.c.bf16 %v43, %v42
    %v101 = vpack.c.bf16 %v45, %v44
    %v102 = vpack.c.bf16 %v47, %v46
    %v103 = vpack.c.bf16 %v49, %v48
    %v104 = vpack.c.bf16 %v51, %v50
    %v105 = vpack.c.bf16 %v53, %v52
    %v106 = vpack.c.bf16 %v55, %v54
    %v107 = vpack.c.bf16 %v57, %v56
    %v108 = vpack.c.bf16 %v59, %v58
    %v109 = vpack.c.bf16 %v61, %v60
    %v110 = vpack.c.bf16 %v63, %v62
    %v111 = vpack.c.bf16 %v65, %v64
    %v112 = vpack.c.bf16 %v67, %v66
    %v113 = vpack.c.bf16 %v69, %v68
    %v114 = vpack.c.bf16 %v71, %v70
    %v115 = vpack.c.bf16 %v73, %v72
    %v116 = vpack.c.bf16 %v75, %v74
    %v117 = vpack.c.bf16 %v77, %v76
    %v118 = vpack.c.bf16 %v79, %v78
    %v119 = vpack.c.bf16 %v81, %v80
    %v120 = vpack.c.bf16 %v83, %v82
    %v121 = vpack.c.bf16 %v85, %v84
    %v122 = vpack.c.bf16 %v87, %v86
    %v123 = vpack.c.bf16 %v89, %v88
    %v124 = vpack.c.bf16 %v91, %v90
    %v125 = vpack.c.bf16 %v93, %v92
    %v126 = vld [vmem:[%s1] sm:$0xf]
    %v127 = vld [vmem:[%s1 + $0x4] sm:$0xf]
    %v128 = vld [vmem:[%s1 + $0x8] sm:$0xf]
    %v129 = vld [vmem:[%s1 + $0xc] sm:$0xf]
    %v130 = vld [vmem:[%s1 + $0x10] sm:$0xf]
    %v131 = vld [vmem:[%s1 + $0x14] sm:$0xf]
    %v132 = vld [vmem:[%s1 + $0x18] sm:$0xf]
    %v133 = vld [vmem:[%s1 + $0x1c] sm:$0xf]
    %v134 = vld [vmem:[%s1 + $0x20] sm:$0xf]
    %v135 = vld [vmem:[%s1 + $0x24] sm:$0xf]
    %v136 = vld [vmem:[%s1 + $0x28] sm:$0xf]
    %v137 = vld [vmem:[%s1 + $0x2c] sm:$0xf]
    %v138 = vld [vmem:[%s1 + $0x30] sm:$0xf]
    %v139 = vld [vmem:[%s1 + $0x34] sm:$0xf]
    %v140 = vld [vmem:[%s1 + $0x38] sm:$0xf]
    %v141 = vld [vmem:[%s1 + $0x3c] sm:$0xf]
    %v142 = vld [vmem:[%s2] sm:$0xff]
    %v143 = vld [vmem:[%s2 + $0x8] sm:$0xff]
    %v144 = vld [vmem:[%s2 + $0x10] sm:$0xff]
    %v145 = vld [vmem:[%s2 + $0x18] sm:$0xff]
    %v146 = vld [vmem:[%s2 + $0x20] sm:$0xff]
    %v147 = vld [vmem:[%s2 + $0x28] sm:$0xff]
    %v148 = vld [vmem:[%s2 + $0x30] sm:$0xff]
    %v149 = vld [vmem:[%s2 + $0x38] sm:$0xff]
    %v150 = vld [vmem:[%s2 + $0x40] sm:$0xff]
    %v151 = vld [vmem:[%s2 + $0x48] sm:$0xff]
    %v152 = vld [vmem:[%s2 + $0x50] sm:$0xff]
    %v153 = vld [vmem:[%s2 + $0x58] sm:$0xff]
    %v154 = vld [vmem:[%s2 + $0x60] sm:$0xff]
    %v155 = vld [vmem:[%s2 + $0x68] sm:$0xff]
    %v156 = vld [vmem:[%s2 + $0x70] sm:$0xff]
    %v157 = vld [vmem:[%s2 + $0x78] sm:$0xff]
    %159 = vset.pattern.permute.xlu0 0
    %160 = vperm.xlu0 %159, %v142
    %v161 = vpop.permute.xlu0 %160
    %164 = vset.pattern.permute.xlu0 0
    %165 = vperm.xlu0 %164, %v143
    %v166 = vpop.permute.xlu0 %165
    %169 = vset.pattern.permute.xlu0 0
    %170 = vperm.xlu0 %169, %v144
    %v171 = vpop.permute.xlu0 %170
    %174 = vset.pattern.permute.xlu0 0
    %175 = vperm.xlu0 %174, %v145
    %v176 = vpop.permute.xlu0 %175
    %179 = vset.pattern.permute.xlu0 0
    %180 = vperm.xlu0 %179, %v146
    %v181 = vpop.permute.xlu0 %180
    %184 = vset.pattern.permute.xlu0 0
    %185 = vperm.xlu0 %184, %v147
    %v186 = vpop.permute.xlu0 %185
    %189 = vset.pattern.permute.xlu0 0
    %190 = vperm.xlu0 %189, %v148
    %v191 = vpop.permute.xlu0 %190
    %194 = vset.pattern.permute.xlu0 0
    %195 = vperm.xlu0 %194, %v149
    %v196 = vpop.permute.xlu0 %195
    %199 = vset.pattern.permute.xlu0 0
    %200 = vperm.xlu0 %199, %v150
    %v201 = vpop.permute.xlu0 %200
    %204 = vset.pattern.permute.xlu0 0
    %205 = vperm.xlu0 %204, %v151
    %v206 = vpop.permute.xlu0 %205
    %209 = vset.pattern.permute.xlu0 0
    %210 = vperm.xlu0 %209, %v152
    %v211 = vpop.permute.xlu0 %210
    %214 = vset.pattern.permute.xlu0 0
    %215 = vperm.xlu0 %214, %v153
    %v216 = vpop.permute.xlu0 %215
    %219 = vset.pattern.permute.xlu0 0
    %220 = vperm.xlu0 %219, %v154
    %v221 = vpop.permute.xlu0 %220
    %224 = vset.pattern.permute.xlu0 0
    %225 = vperm.xlu0 %224, %v155
    %v226 = vpop.permute.xlu0 %225
    %229 = vset.pattern.permute.xlu0 0
    %230 = vperm.xlu0 %229, %v156
    %v231 = vpop.permute.xlu0 %230
    %234 = vset.pattern.permute.xlu0 0
    %235 = vperm.xlu0 %234, %v157
    %v236 = vpop.permute.xlu0 %235
    %v254 = vunpack.c.l.b16 %v126
    %v255 = vunpack.c.l.b16 %v127
    %v256 = vunpack.c.l.b16 %v128
    %v257 = vunpack.c.l.b16 %v129
    %v258 = vunpack.c.l.b16 %v130
    %v259 = vunpack.c.l.b16 %v131
    %v260 = vunpack.c.l.b16 %v132
    %v261 = vunpack.c.l.b16 %v133
    %v262 = vunpack.c.l.b16 %v134
    %v263 = vunpack.c.l.b16 %v135
    %v264 = vunpack.c.l.b16 %v136
    %v265 = vunpack.c.l.b16 %v137
    %v266 = vunpack.c.l.b16 %v138
    %v267 = vunpack.c.l.b16 %v139
    %v268 = vunpack.c.l.b16 %v140
    %v269 = vunpack.c.l.b16 %v141
    %v270 = vpack.c.b16 %v255, %v254
    %v271 = vpack.c.b16 %v257, %v256
    %v272 = vpack.c.b16 %v259, %v258
    %v273 = vpack.c.b16 %v261, %v260
    %v274 = vpack.c.b16 %v263, %v262
    %v275 = vpack.c.b16 %v265, %v264
    %v276 = vpack.c.b16 %v267, %v266
    %v277 = vpack.c.b16 %v269, %v268
    %vm278 = vcmask 392192
    %v280 = vsel %vm278, %v270, 0
    %v283 = vsel %vm278, %v271, 0
    %v286 = vsel %vm278, %v272, 0
    %v289 = vsel %vm278, %v273, 0
    %v292 = vsel %vm278, %v274, 0
    %v295 = vsel %vm278, %v275, 0
    %v298 = vsel %vm278, %v276, 0
    %v301 = vsel %vm278, %v277, 0
    %v304 = vsel %vm278, %v94, 0
    %v307 = vsel %vm278, %v95, 0
    %v310 = vsel %vm278, %v96, 0
    %v313 = vsel %vm278, %v97, 0
    %v316 = vsel %vm278, %v98, 0
    %v319 = vsel %vm278, %v99, 0
    %v322 = vsel %vm278, %v100, 0
    %v325 = vsel %vm278, %v101, 0
    %v328 = vsel %vm278, %v102, 0
    %v331 = vsel %vm278, %v103, 0
    %v334 = vsel %vm278, %v104, 0
    %v337 = vsel %vm278, %v105, 0
    %v340 = vsel %vm278, %v106, 0
    %v343 = vsel %vm278, %v107, 0
    %v346 = vsel %vm278, %v108, 0
    %v349 = vsel %vm278, %v109, 0
    %v352 = vsel %vm278, %v110, 0
    %v355 = vsel %vm278, %v111, 0
    %v358 = vsel %vm278, %v112, 0
    %v361 = vsel %vm278, %v113, 0
    %v364 = vsel %vm278, %v114, 0
    %v367 = vsel %vm278, %v115, 0
    %v370 = vsel %vm278, %v116, 0
    %v373 = vsel %vm278, %v117, 0
    %v376 = vsel %vm278, %v118, 0
    %v379 = vsel %vm278, %v119, 0
    %v382 = vsel %vm278, %v120, 0
    %v385 = vsel %vm278, %v121, 0
    %v388 = vsel %vm278, %v122, 0
    %v391 = vsel %vm278, %v123, 0
    %v394 = vsel %vm278, %v124, 0
    %v397 = vsel %vm278, %v125, 0
    %399 = vmatprep.subr.bf16.mxu0 0
    %400 = vmatpush1.bf16.xpose.msra.mxu0 %v304
    %401 = vmatprep.subr.bf16.mxu0 0
    %402 = vmatpush1.bf16.xpose.msra.mxu0 %v307
    %403 = vmatprep.subr.bf16.mxu0 0
    %404 = vmatpush1.bf16.xpose.msra.mxu0 %v310
    %405 = vmatprep.subr.bf16.mxu0 0
    %406 = vmatpush1.bf16.xpose.msra.mxu0 %v313
    %407 = vmatprep.subr.bf16.mxu0 0
    %408 = vmatpush1.bf16.xpose.msra.mxu0 %v316
    %409 = vmatprep.subr.bf16.mxu0 0
    %410 = vmatpush1.bf16.xpose.msra.mxu0 %v319
    %411 = vmatprep.subr.bf16.mxu0 0
    %412 = vmatpush1.bf16.xpose.msra.mxu0 %v322
    %413 = vmatprep.subr.bf16.mxu0 0
    %414 = vmatpush1.bf16.xpose.msra.mxu0 %v325
    %415 = vmatprep.subr.bf16.mxu0 0
    %416 = vmatpush1.bf16.xpose.msra.mxu0 %v328
    %417 = vmatprep.subr.bf16.mxu0 0
    %418 = vmatpush1.bf16.xpose.msra.mxu0 %v331
    %419 = vmatprep.subr.bf16.mxu0 0
    %420 = vmatpush1.bf16.xpose.msra.mxu0 %v334
    %421 = vmatprep.subr.bf16.mxu0 0
    %422 = vmatpush1.bf16.xpose.msra.mxu0 %v337
    %423 = vmatprep.subr.bf16.mxu0 0
    %424 = vmatpush1.bf16.xpose.msra.mxu0 %v340
    %425 = vmatprep.subr.bf16.mxu0 0
    %426 = vmatpush1.bf16.xpose.msra.mxu0 %v343
    %427 = vmatprep.subr.bf16.mxu0 0
    %428 = vmatpush1.bf16.xpose.msra.mxu0 %v346
    %429 = vmatprep.subr.bf16.mxu0 0
    %430 = vmatpush1.bf16.xpose.msra.mxu0 %v349
    %431 = vmatprep.mubr.bf16.mxu0 0
    %432 = vmatmul.mubr.bf16.gmra.mrb[0].mxu0 %v280
    %v433 = vpop.f32.mrb[0].mxu0
    %v434 = vadd.f32 %v161, %v433
    %v435 = vpop.f32.mrb[0].mxu0
    %v436 = vadd.f32 %v161, %v435
    %v437 = vpop.f32.mrb[0].mxu0
    %v438 = vadd.f32 %v166, %v437
    %v439 = vpop.f32.mrb[0].mxu0
    %v440 = vadd.f32 %v166, %v439
    %441 = vmatprep.mubr.bf16.mxu0 0
    %442 = vmatmul.mubr.bf16.gmra.mrb[0].mxu0 %v283
    %v443 = vpop.f32.mrb[0].mxu0
    %v444 = vadd.f32 %v171, %v443
    %v445 = vpop.f32.mrb[0].mxu0
    %v446 = vadd.f32 %v171, %v445
    %v447 = vpop.f32.mrb[0].mxu0
    %v448 = vadd.f32 %v176, %v447
    %v449 = vpop.f32.mrb[0].mxu0
    %v450 = vadd.f32 %v176, %v449
    %451 = vmatprep.mubr.bf16.mxu0 0
    %452 = vmatmul.mubr.bf16.gmra.mrb[0].mxu0 %v286
    %v453 = vpop.f32.mrb[0].mxu0
    %v454 = vadd.f32 %v181, %v453
    %v455 = vpop.f32.mrb[0].mxu0
    %v456 = vadd.f32 %v181, %v455
    %v457 = vpop.f32.mrb[0].mxu0
    %v458 = vadd.f32 %v186, %v457
    %v459 = vpop.f32.mrb[0].mxu0
    %v460 = vadd.f32 %v186, %v459
    %461 = vmatprep.mubr.bf16.mxu0 0
    %462 = vmatmul.mubr.bf16.gmra.mrb[0].mxu0 %v289
    %v463 = vpop.f32.mrb[0].mxu0
    %v464 = vadd.f32 %v191, %v463
    %v465 = vpop.f32.mrb[0].mxu0
    %v466 = vadd.f32 %v191, %v465
    %v467 = vpop.f32.mrb[0].mxu0
    %v468 = vadd.f32 %v196, %v467
    %v469 = vpop.f32.mrb[0].mxu0
    %v470 = vadd.f32 %v196, %v469
    %471 = vmatprep.mubr.bf16.mxu0 0
    %472 = vmatmul.mubr.bf16.gmra.mrb[0].mxu0 %v292
    %v473 = vpop.f32.mrb[0].mxu0
    %v474 = vadd.f32 %v201, %v473
    %v475 = vpop.f32.mrb[0].mxu0
    %v476 = vadd.f32 %v201, %v475
    %v477 = vpop.f32.mrb[0].mxu0
    %v478 = vadd.f32 %v206, %v477
    %v479 = vpop.f32.mrb[0].mxu0
    %v480 = vadd.f32 %v206, %v479
    %481 = vmatprep.mubr.bf16.mxu0 0
    %482 = vmatmul.mubr.bf16.gmra.mrb[0].mxu0 %v295
    %v483 = vpop.f32.mrb[0].mxu0
    %v484 = vadd.f32 %v211, %v483
    %v485 = vpop.f32.mrb[0].mxu0
    %v486 = vadd.f32 %v211, %v485
    %v487 = vpop.f32.mrb[0].mxu0
    %v488 = vadd.f32 %v216, %v487
    %v489 = vpop.f32.mrb[0].mxu0
    %v490 = vadd.f32 %v216, %v489
    %491 = vmatprep.mubr.bf16.mxu0 0
    %492 = vmatmul.mubr.bf16.gmra.mrb[0].mxu0 %v298
    %v493 = vpop.f32.mrb[0].mxu0
    %v494 = vadd.f32 %v221, %v493
    %v495 = vpop.f32.mrb[0].mxu0
    %v496 = vadd.f32 %v221, %v495
    %v497 = vpop.f32.mrb[0].mxu0
    %v498 = vadd.f32 %v226, %v497
    %v499 = vpop.f32.mrb[0].mxu0
    %v500 = vadd.f32 %v226, %v499
    %501 = vmatprep.mubr.bf16.mxu0 0
    %502 = vmatmul.mubr.bf16.gmra.mrb[0].mxu0 %v301
    %v503 = vpop.f32.mrb[0].mxu0
    %v504 = vadd.f32 %v231, %v503
    %v505 = vpop.f32.mrb[0].mxu0
    %v506 = vadd.f32 %v231, %v505
    %v507 = vpop.f32.mrb[0].mxu0
    %v508 = vadd.f32 %v236, %v507
    %v509 = vpop.f32.mrb[0].mxu0
    %v510 = vadd.f32 %v236, %v509
    %511 = vdwg.mxu0
    %512 = vmatprep.subr.bf16.mxu0 0
    %513 = vmatpush1.bf16.xpose.msra.mxu0 %v352
    %514 = vmatprep.subr.bf16.mxu0 0
    %515 = vmatpush1.bf16.xpose.msra.mxu0 %v355
    %516 = vmatprep.subr.bf16.mxu0 0
    %517 = vmatpush1.bf16.xpose.msra.mxu0 %v358
    %518 = vmatprep.subr.bf16.mxu0 0
    %519 = vmatpush1.bf16.xpose.msra.mxu0 %v361
    %520 = vmatprep.subr.bf16.mxu0 0
    %521 = vmatpush1.bf16.xpose.msra.mxu0 %v364
    %522 = vmatprep.subr.bf16.mxu0 0
    %523 = vmatpush1.bf16.xpose.msra.mxu0 %v367
    %524 = vmatprep.subr.bf16.mxu0 0
    %525 = vmatpush1.bf16.xpose.msra.mxu0 %v370
    %526 = vmatprep.subr.bf16.mxu0 0
    %527 = vmatpush1.bf16.xpose.msra.mxu0 %v373
    %528 = vmatprep.subr.bf16.mxu0 0
    %529 = vmatpush1.bf16.xpose.msra.mxu0 %v376
    %530 = vmatprep.subr.bf16.mxu0 0
    %531 = vmatpush1.bf16.xpose.msra.mxu0 %v379
    %532 = vmatprep.subr.bf16.mxu0 0
    %533 = vmatpush1.bf16.xpose.msra.mxu0 %v382
    %534 = vmatprep.subr.bf16.mxu0 0
    %535 = vmatpush1.bf16.xpose.msra.mxu0 %v385
    %536 = vmatprep.subr.bf16.mxu0 0
    %537 = vmatpush1.bf16.xpose.msra.mxu0 %v388
    %538 = vmatprep.subr.bf16.mxu0 0
    %539 = vmatpush1.bf16.xpose.msra.mxu0 %v391
    %540 = vmatprep.subr.bf16.mxu0 0
    %541 = vmatpush1.bf16.xpose.msra.mxu0 %v394
    %542 = vmatprep.subr.bf16.mxu0 0
    %543 = vmatpush1.bf16.xpose.msra.mxu0 %v397
    %544 = vmatprep.mubr.bf16.mxu0 0
    %545 = vmatmul.mubr.bf16.gmra.mrb[0].mxu0 %v280
    %v546 = vpop.f32.mrb[0].mxu0
    %v547 = vadd.f32 %v161, %v546
    %v548 = vpop.f32.mrb[0].mxu0
    %v549 = vadd.f32 %v161, %v548
    %v550 = vpop.f32.mrb[0].mxu0
    %v551 = vadd.f32 %v166, %v550
    %v552 = vpop.f32.mrb[0].mxu0
    %v553 = vadd.f32 %v166, %v552
    %554 = vmatprep.mubr.bf16.mxu0 0
    %555 = vmatmul.mubr.bf16.gmra.mrb[0].mxu0 %v283
    %v556 = vpop.f32.mrb[0].mxu0
    %v557 = vadd.f32 %v171, %v556
    %v558 = vpop.f32.mrb[0].mxu0
    %v559 = vadd.f32 %v171, %v558
    %v560 = vpop.f32.mrb[0].mxu0
    %v561 = vadd.f32 %v176, %v560
    %v562 = vpop.f32.mrb[0].mxu0
    %v563 = vadd.f32 %v176, %v562
    %564 = vmatprep.mubr.bf16.mxu0 0
    %565 = vmatmul.mubr.bf16.gmra.mrb[0].mxu0 %v286
    %v566 = vpop.f32.mrb[0].mxu0
    %v567 = vadd.f32 %v181, %v566
    %v568 = vpop.f32.mrb[0].mxu0
    %v569 = vadd.f32 %v181, %v568
    %v570 = vpop.f32.mrb[0].mxu0
    %v571 = vadd.f32 %v186, %v570
    %v572 = vpop.f32.mrb[0].mxu0
    %v573 = vadd.f32 %v186, %v572
    %574 = vmatprep.mubr.bf16.mxu0 0
    %575 = vmatmul.mubr.bf16.gmra.mrb[0].mxu0 %v289
    %v576 = vpop.f32.mrb[0].mxu0
    %v577 = vadd.f32 %v191, %v576
    %v578 = vpop.f32.mrb[0].mxu0
    %v579 = vadd.f32 %v191, %v578
    %v580 = vpop.f32.mrb[0].mxu0
    %v581 = vadd.f32 %v196, %v580
    %v582 = vpop.f32.mrb[0].mxu0
    %v583 = vadd.f32 %v196, %v582
    %584 = vmatprep.mubr.bf16.mxu0 0
    %585 = vmatmul.mubr.bf16.gmra.mrb[0].mxu0 %v292
    %v586 = vpop.f32.mrb[0].mxu0
    %v587 = vadd.f32 %v201, %v586
    %v588 = vpop.f32.mrb[0].mxu0
    %v589 = vadd.f32 %v201, %v588
    %v590 = vpop.f32.mrb[0].mxu0
    %v591 = vadd.f32 %v206, %v590
    %v592 = vpop.f32.mrb[0].mxu0
    %v593 = vadd.f32 %v206, %v592
    %594 = vmatprep.mubr.bf16.mxu0 0
    %595 = vmatmul.mubr.bf16.gmra.mrb[0].mxu0 %v295
    %v596 = vpop.f32.mrb[0].mxu0
    %v597 = vadd.f32 %v211, %v596
    %v598 = vpop.f32.mrb[0].mxu0
    %v599 = vadd.f32 %v211, %v598
    %v600 = vpop.f32.mrb[0].mxu0
    %v601 = vadd.f32 %v216, %v600
    %v602 = vpop.f32.mrb[0].mxu0
    %v603 = vadd.f32 %v216, %v602
    %604 = vmatprep.mubr.bf16.mxu0 0
    %605 = vmatmul.mubr.bf16.gmra.mrb[0].mxu0 %v298
    %v606 = vpop.f32.mrb[0].mxu0
    %v607 = vadd.f32 %v221, %v606
    %v608 = vpop.f32.mrb[0].mxu0
    %v609 = vadd.f32 %v221, %v608
    %v610 = vpop.f32.mrb[0].mxu0
    %v611 = vadd.f32 %v226, %v610
    %v612 = vpop.f32.mrb[0].mxu0
    %v613 = vadd.f32 %v226, %v612
    %614 = vmatprep.mubr.bf16.mxu0 0
    %615 = vmatmul.mubr.bf16.gmra.mrb[0].mxu0 %v301
    %v616 = vpop.f32.mrb[0].mxu0
    %v617 = vadd.f32 %v231, %v616
    %v618 = vpop.f32.mrb[0].mxu0
    %v619 = vadd.f32 %v231, %v618
    %v620 = vpop.f32.mrb[0].mxu0
    %v621 = vadd.f32 %v236, %v620
    %v622 = vpop.f32.mrb[0].mxu0
    %v623 = vadd.f32 %v236, %v622
    %624 = vdwg.mxu0
    %v625 = vmax.f32 %v434, 0.0
    %v626 = vmax.f32 %v436, 0.0
    %v627 = vmax.f32 %v547, 0.0
    %v628 = vmax.f32 %v549, 0.0
    %v629 = vmax.f32 %v438, 0.0
    %v630 = vmax.f32 %v440, 0.0
    %v631 = vmax.f32 %v551, 0.0
    %v632 = vmax.f32 %v553, 0.0
    %v633 = vmax.f32 %v444, 0.0
    %v634 = vmax.f32 %v446, 0.0
    %v635 = vmax.f32 %v557, 0.0
    %v636 = vmax.f32 %v559, 0.0
    %v637 = vmax.f32 %v448, 0.0
    %v638 = vmax.f32 %v450, 0.0
    %v639 = vmax.f32 %v561, 0.0
    %v640 = vmax.f32 %v563, 0.0
    %v641 = vmax.f32 %v454, 0.0
    %v642 = vmax.f32 %v456, 0.0
    %v643 = vmax.f32 %v567, 0.0
    %v644 = vmax.f32 %v569, 0.0
    %v645 = vmax.f32 %v458, 0.0
    %v646 = vmax.f32 %v460, 0.0
    %v647 = vmax.f32 %v571, 0.0
    %v648 = vmax.f32 %v573, 0.0
    %v649 = vmax.f32 %v464, 0.0
    %v650 = vmax.f32 %v466, 0.0
    %v651 = vmax.f32 %v577, 0.0
    %v652 = vmax.f32 %v579, 0.0
    %v653 = vmax.f32 %v468, 0.0
    %v654 = vmax.f32 %v470, 0.0
    %v655 = vmax.f32 %v581, 0.0
    %v656 = vmax.f32 %v583, 0.0
    %v657 = vmax.f32 %v474, 0.0
    %v658 = vmax.f32 %v476, 0.0
    %v659 = vmax.f32 %v587, 0.0
    %v660 = vmax.f32 %v589, 0.0
    %v661 = vmax.f32 %v478, 0.0
    %v662 = vmax.f32 %v480, 0.0
    %v663 = vmax.f32 %v591, 0.0
    %v664 = vmax.f32 %v593, 0.0
    %v665 = vmax.f32 %v484, 0.0
    %v666 = vmax.f32 %v486, 0.0
    %v667 = vmax.f32 %v597, 0.0
    %v668 = vmax.f32 %v599, 0.0
    %v669 = vmax.f32 %v488, 0.0
    %v670 = vmax.f32 %v490, 0.0
    %v671 = vmax.f32 %v601, 0.0
    %v672 = vmax.f32 %v603, 0.0
    %v673 = vmax.f32 %v494, 0.0
    %v674 = vmax.f32 %v496, 0.0
    %v675 = vmax.f32 %v607, 0.0
    %v676 = vmax.f32 %v609, 0.0
    %v677 = vmax.f32 %v498, 0.0
    %v678 = vmax.f32 %v500, 0.0
    %v679 = vmax.f32 %v611, 0.0
    %v680 = vmax.f32 %v613, 0.0
    %v681 = vmax.f32 %v504, 0.0
    %v682 = vmax.f32 %v506, 0.0
    %v683 = vmax.f32 %v617, 0.0
    %v684 = vmax.f32 %v619, 0.0
    %v685 = vmax.f32 %v508, 0.0
    %v686 = vmax.f32 %v510, 0.0
    %v687 = vmax.f32 %v621, 0.0
    %v688 = vmax.f32 %v623, 0.0
    %v689 = vpack.c.bf16 %v629, %v625
    %v690 = vpack.c.bf16 %v630, %v626
    %v691 = vpack.c.bf16 %v631, %v627
    %v692 = vpack.c.bf16 %v632, %v628
    %v693 = vpack.c.bf16 %v637, %v633
    %v694 = vpack.c.bf16 %v638, %v634
    %v695 = vpack.c.bf16 %v639, %v635
    %v696 = vpack.c.bf16 %v640, %v636
    %v697 = vpack.c.bf16 %v645, %v641
    %v698 = vpack.c.bf16 %v646, %v642
    %v699 = vpack.c.bf16 %v647, %v643
    %v700 = vpack.c.bf16 %v648, %v644
    %v701 = vpack.c.bf16 %v653, %v649
    %v702 = vpack.c.bf16 %v654, %v650
    %v703 = vpack.c.bf16 %v655, %v651
    %v704 = vpack.c.bf16 %v656, %v652
    %v705 = vpack.c.bf16 %v661, %v657
    %v706 = vpack.c.bf16 %v662, %v658
    %v707 = vpack.c.bf16 %v663, %v659
    %v708 = vpack.c.bf16 %v664, %v660
    %v709 = vpack.c.bf16 %v669, %v665
    %v710 = vpack.c.bf16 %v670, %v666
    %v711 = vpack.c.bf16 %v671, %v667
    %v712 = vpack.c.bf16 %v672, %v668
    %v713 = vpack.c.bf16 %v677, %v673
    %v714 = vpack.c.bf16 %v678, %v674
    %v715 = vpack.c.bf16 %v679, %v675
    %v716 = vpack.c.bf16 %v680, %v676
    %v717 = vpack.c.bf16 %v685, %v681
    %v718 = vpack.c.bf16 %v686, %v682
    %v719 = vpack.c.bf16 %v687, %v683
    %v720 = vpack.c.bf16 %v688, %v684
    %v721 = vld [vmem:[%s3] sm:$0xf]
    %v722 = vld [vmem:[%s3 + $0x4] sm:$0xf]
    %v723 = vld [vmem:[%s3 + $0x8] sm:$0xf]
    %v724 = vld [vmem:[%s3 + $0xc] sm:$0xf]
    %v725 = vld [vmem:[%s3 + $0x10] sm:$0xf]
    %v726 = vld [vmem:[%s3 + $0x14] sm:$0xf]
    %v727 = vld [vmem:[%s3 + $0x18] sm:$0xf]
    %v728 = vld [vmem:[%s3 + $0x1c] sm:$0xf]
    %v729 = vld [vmem:[%s3 + $0x20] sm:$0xf]
    %v730 = vld [vmem:[%s3 + $0x24] sm:$0xf]
    %v731 = vld [vmem:[%s3 + $0x28] sm:$0xf]
    %v732 = vld [vmem:[%s3 + $0x2c] sm:$0xf]
    %v733 = vld [vmem:[%s3 + $0x30] sm:$0xf]
    %v734 = vld [vmem:[%s3 + $0x34] sm:$0xf]
    %v735 = vld [vmem:[%s3 + $0x38] sm:$0xf]
    %v736 = vld [vmem:[%s3 + $0x3c] sm:$0xf]
    %v737 = vld [vmem:[%s4] sm:$0xff]
    %v738 = vld [vmem:[%s4 + $0x8] sm:$0xff]
    %v739 = vld [vmem:[%s4 + $0x10] sm:$0xff]
    %v740 = vld [vmem:[%s4 + $0x18] sm:$0xff]
    %v741 = vld [vmem:[%s4 + $0x20] sm:$0xff]
    %v742 = vld [vmem:[%s4 + $0x28] sm:$0xff]
    %v743 = vld [vmem:[%s4 + $0x30] sm:$0xff]
    %v744 = vld [vmem:[%s4 + $0x38] sm:$0xff]
    %v745 = vld [vmem:[%s4 + $0x40] sm:$0xff]
    %v746 = vld [vmem:[%s4 + $0x48] sm:$0xff]
    %v747 = vld [vmem:[%s4 + $0x50] sm:$0xff]
    %v748 = vld [vmem:[%s4 + $0x58] sm:$0xff]
    %v749 = vld [vmem:[%s4 + $0x60] sm:$0xff]
    %v750 = vld [vmem:[%s4 + $0x68] sm:$0xff]
    %v751 = vld [vmem:[%s4 + $0x70] sm:$0xff]
    %v752 = vld [vmem:[%s4 + $0x78] sm:$0xff]
    %754 = vset.pattern.permute.xlu0 0
    %755 = vperm.xlu0 %754, %v737
    %v756 = vpop.permute.xlu0 %755
    %759 = vset.pattern.permute.xlu0 0
    %760 = vperm.xlu0 %759, %v738
    %v761 = vpop.permute.xlu0 %760
    %764 = vset.pattern.permute.xlu0 0
    %765 = vperm.xlu0 %764, %v739
    %v766 = vpop.permute.xlu0 %765
    %769 = vset.pattern.permute.xlu0 0
    %770 = vperm.xlu0 %769, %v740
    %v771 = vpop.permute.xlu0 %770
    %774 = vset.pattern.permute.xlu0 0
    %775 = vperm.xlu0 %774, %v741
    %v776 = vpop.permute.xlu0 %775
    %779 = vset.pattern.permute.xlu0 0
    %780 = vperm.xlu0 %779, %v742
    %v781 = vpop.permute.xlu0 %780
    %784 = vset.pattern.permute.xlu0 0
    %785 = vperm.xlu0 %784, %v743
    %v786 = vpop.permute.xlu0 %785
    %789 = vset.pattern.permute.xlu0 0
    %790 = vperm.xlu0 %789, %v744
    %v791 = vpop.permute.xlu0 %790
    %794 = vset.pattern.permute.xlu0 0
    %795 = vperm.xlu0 %794, %v745
    %v796 = vpop.permute.xlu0 %795
    %799 = vset.pattern.permute.xlu0 0
    %800 = vperm.xlu0 %799, %v746
    %v801 = vpop.permute.xlu0 %800
    %804 = vset.pattern.permute.xlu0 0
    %805 = vperm.xlu0 %804, %v747
    %v806 = vpop.permute.xlu0 %805
    %809 = vset.pattern.permute.xlu0 0
    %810 = vperm.xlu0 %809, %v748
    %v811 = vpop.permute.xlu0 %810
    %814 = vset.pattern.permute.xlu0 0
    %815 = vperm.xlu0 %814, %v749
    %v816 = vpop.permute.xlu0 %815
    %819 = vset.pattern.permute.xlu0 0
    %820 = vperm.xlu0 %819, %v750
    %v821 = vpop.permute.xlu0 %820
    %824 = vset.pattern.permute.xlu0 0
    %825 = vperm.xlu0 %824, %v751
    %v826 = vpop.permute.xlu0 %825
    %829 = vset.pattern.permute.xlu0 0
    %830 = vperm.xlu0 %829, %v752
    %v831 = vpop.permute.xlu0 %830
    %v849 = vunpack.c.l.b16 %v721
    %v850 = vunpack.c.l.b16 %v722
    %v851 = vunpack.c.l.b16 %v723
    %v852 = vunpack.c.l.b16 %v724
    %v853 = vunpack.c.l.b16 %v725
    %v854 = vunpack.c.l.b16 %v726
    %v855 = vunpack.c.l.b16 %v727
    %v856 = vunpack.c.l.b16 %v728
    %v857 = vunpack.c.l.b16 %v729
    %v858 = vunpack.c.l.b16 %v730
    %v859 = vunpack.c.l.b16 %v731
    %v860 = vunpack.c.l.b16 %v732
    %v861 = vunpack.c.l.b16 %v733
    %v862 = vunpack.c.l.b16 %v734
    %v863 = vunpack.c.l.b16 %v735
    %v864 = vunpack.c.l.b16 %v736
    %v865 = vpack.c.b16 %v850, %v849
    %v866 = vpack.c.b16 %v852, %v851
    %v867 = vpack.c.b16 %v854, %v853
    %v868 = vpack.c.b16 %v856, %v855
    %v869 = vpack.c.b16 %v858, %v857
    %v870 = vpack.c.b16 %v860, %v859
    %v871 = vpack.c.b16 %v862, %v861
    %v872 = vpack.c.b16 %v864, %v863
    %881 = vmatprep.subr.bf16.mxu0 %v690
    %882 = vmatpush1.bf16.msra.mxu0 %v689
    %883 = vmatprep.subr.bf16.mxu0 %v694
    %884 = vmatpush1.bf16.msra.mxu0 %v693
    %885 = vmatprep.subr.bf16.mxu0 %v698
    %886 = vmatpush1.bf16.msra.mxu0 %v697
    %887 = vmatprep.subr.bf16.mxu0 %v702
    %888 = vmatpush1.bf16.msra.mxu0 %v701
    %889 = vmatprep.subr.bf16.mxu0 %v706
    %890 = vmatpush1.bf16.msra.mxu0 %v705
    %891 = vmatprep.subr.bf16.mxu0 %v710
    %892 = vmatpush1.bf16.msra.mxu0 %v709
    %893 = vmatprep.subr.bf16.mxu0 %v714
    %894 = vmatpush1.bf16.msra.mxu0 %v713
    %895 = vmatprep.subr.bf16.mxu0 %v718
    %896 = vmatpush1.bf16.msra.mxu0 %v717
    %897 = vmatprep.subr.bf16.mxu0 0
    %898 = vmatpush1.bf16.msra.mxu0 0
    %899 = vmatprep.subr.bf16.mxu0 0
    %900 = vmatpush1.bf16.msra.mxu0 0
    %901 = vmatprep.subr.bf16.mxu0 0
    %902 = vmatpush1.bf16.msra.mxu0 0
    %903 = vmatprep.subr.bf16.mxu0 0
    %904 = vmatpush1.bf16.msra.mxu0 0
    %905 = vmatprep.subr.bf16.mxu0 0
    %906 = vmatpush1.bf16.msra.mxu0 0
    %907 = vmatprep.subr.bf16.mxu0 0
    %908 = vmatpush1.bf16.msra.mxu0 0
    %909 = vmatprep.subr.bf16.mxu0 0
    %910 = vmatpush1.bf16.msra.mxu0 0
    %911 = vmatprep.subr.bf16.mxu0 0
    %912 = vmatpush1.bf16.msra.mxu0 0
    %913 = vmatprep.mubr.bf16.mxu0 0
    %914 = vmatmul.mubr.bf16.gmra.mrb[0].mxu0 %v865
    %v915 = vpop.f32.mrb[0].mxu0
    %v916 = vadd.f32 %v756, %v915
    %v917 = vpop.f32.mrb[0].mxu0
    %v918 = vadd.f32 %v756, %v917
    %v919 = vpop.f32.mrb[0].mxu0
    %v920 = vadd.f32 %v761, %v919
    %v921 = vpop.f32.mrb[0].mxu0
    %v922 = vadd.f32 %v761, %v921
    %923 = vmatprep.mubr.bf16.mxu0 0
    %924 = vmatmul.mubr.bf16.gmra.mrb[0].mxu0 %v866
    %v925 = vpop.f32.mrb[0].mxu0
    %v926 = vadd.f32 %v766, %v925
    %v927 = vpop.f32.mrb[0].mxu0
    %v928 = vadd.f32 %v766, %v927
    %v929 = vpop.f32.mrb[0].mxu0
    %v930 = vadd.f32 %v771, %v929
    %v931 = vpop.f32.mrb[0].mxu0
    %v932 = vadd.f32 %v771, %v931
    %933 = vmatprep.mubr.bf16.mxu0 0
    %934 = vmatmul.mubr.bf16.gmra.mrb[0].mxu0 %v867
    %v935 = vpop.f32.mrb[0].mxu0
    %v936 = vadd.f32 %v776, %v935
    %v937 = vpop.f32.mrb[0].mxu0
    %v938 = vadd.f32 %v776, %v937
    %v939 = vpop.f32.mrb[0].mxu0
    %v940 = vadd.f32 %v781, %v939
    %v941 = vpop.f32.mrb[0].mxu0
    %v942 = vadd.f32 %v781, %v941
    %943 = vmatprep.mubr.bf16.mxu0 0
    %944 = vmatmul.mubr.bf16.gmra.mrb[0].mxu0 %v868
    %v945 = vpop.f32.mrb[0].mxu0
    %v946 = vadd.f32 %v786, %v945
    %v947 = vpop.f32.mrb[0].mxu0
    %v948 = vadd.f32 %v786, %v947
    %v949 = vpop.f32.mrb[0].mxu0
    %v950 = vadd.f32 %v791, %v949
    %v951 = vpop.f32.mrb[0].mxu0
    %v952 = vadd.f32 %v791, %v951
    %953 = vmatprep.mubr.bf16.mxu0 0
    %954 = vmatmul.mubr.bf16.gmra.mrb[0].mxu0 %v869
    %v955 = vpop.f32.mrb[0].mxu0
    %v956 = vadd.f32 %v796, %v955
    %v957 = vpop.f32.mrb[0].mxu0
    %v958 = vadd.f32 %v796, %v957
    %v959 = vpop.f32.mrb[0].mxu0
    %v960 = vadd.f32 %v801, %v959
    %v961 = vpop.f32.mrb[0].mxu0
    %v962 = vadd.f32 %v801, %v961
    %963 = vmatprep.mubr.bf16.mxu0 0
    %964 = vmatmul.mubr.bf16.gmra.mrb[0].mxu0 %v870
    %v965 = vpop.f32.mrb[0].mxu0
    %v966 = vadd.f32 %v806, %v965
    %v967 = vpop.f32.mrb[0].mxu0
    %v968 = vadd.f32 %v806, %v967
    %v969 = vpop.f32.mrb[0].mxu0
    %v970 = vadd.f32 %v811, %v969
    %v971 = vpop.f32.mrb[0].mxu0
    %v972 = vadd.f32 %v811, %v971
    %973 = vmatprep.mubr.bf16.mxu0 0
    %974 = vmatmul.mubr.bf16.gmra.mrb[0].mxu0 %v871
    %v975 = vpop.f32.mrb[0].mxu0
    %v976 = vadd.f32 %v816, %v975
    %v977 = vpop.f32.mrb[0].mxu0
    %v978 = vadd.f32 %v816, %v977
    %v979 = vpop.f32.mrb[0].mxu0
    %v980 = vadd.f32 %v821, %v979
    %v981 = vpop.f32.mrb[0].mxu0
    %v982 = vadd.f32 %v821, %v981
    %983 = vmatprep.mubr.bf16.mxu0 0
    %984 = vmatmul.mubr.bf16.gmra.mrb[0].mxu0 %v872
    %v985 = vpop.f32.mrb[0].mxu0
    %v986 = vadd.f32 %v826, %v985
    %v987 = vpop.f32.mrb[0].mxu0
    %v988 = vadd.f32 %v826, %v987
    %v989 = vpop.f32.mrb[0].mxu0
    %v990 = vadd.f32 %v831, %v989
    %v991 = vpop.f32.mrb[0].mxu0
    %v992 = vadd.f32 %v831, %v991
    %993 = vdwg.mxu0
    %994 = vmatprep.subr.bf16.mxu0 %v692
    %995 = vmatpush1.bf16.msra.mxu0 %v691
    %996 = vmatprep.subr.bf16.mxu0 %v696
    %997 = vmatpush1.bf16.msra.mxu0 %v695
    %998 = vmatprep.subr.bf16.mxu0 %v700
    %999 = vmatpush1.bf16.msra.mxu0 %v699
    %1000 = vmatprep.subr.bf16.mxu0 %v704
    %1001 = vmatpush1.bf16.msra.mxu0 %v703
    %1002 = vmatprep.subr.bf16.mxu0 %v708
    %1003 = vmatpush1.bf16.msra.mxu0 %v707
    %1004 = vmatprep.subr.bf16.mxu0 %v712
    %1005 = vmatpush1.bf16.msra.mxu0 %v711
    %1006 = vmatprep.subr.bf16.mxu0 %v716
    %1007 = vmatpush1.bf16.msra.mxu0 %v715
    %1008 = vmatprep.subr.bf16.mxu0 %v720
    %1009 = vmatpush1.bf16.msra.mxu0 %v719
    %1010 = vmatprep.subr.bf16.mxu0 0
    %1011 = vmatpush1.bf16.msra.mxu0 0
    %1012 = vmatprep.subr.bf16.mxu0 0
    %1013 = vmatpush1.bf16.msra.mxu0 0
    %1014 = vmatprep.subr.bf16.mxu0 0
    %1015 = vmatpush1.bf16.msra.mxu0 0
    %1016 = vmatprep.subr.bf16.mxu0 0
    %1017 = vmatpush1.bf16.msra.mxu0 0
    %1018 = vmatprep.subr.bf16.mxu0 0
    %1019 = vmatpush1.bf16.msra.mxu0 0
    %1020 = vmatprep.subr.bf16.mxu0 0
    %1021 = vmatpush1.bf16.msra.mxu0 0
    %1022 = vmatprep.subr.bf16.mxu0 0
    %1023 = vmatpush1.bf16.msra.mxu0 0
    %1024 = vmatprep.subr.bf16.mxu0 0
    %1025 = vmatpush1.bf16.msra.mxu0 0
    %1026 = vmatprep.mubr.bf16.mxu0 0
    %1027 = vmatmul.mubr.bf16.gmra.mrb[0].mxu0 %v865
    %v1028 = vpop.f32.mrb[0].mxu0
    %v1029 = vadd.f32 %v756, %v1028
    %v1030 = vpop.f32.mrb[0].mxu0
    %v1031 = vadd.f32 %v756, %v1030
    %v1032 = vpop.f32.mrb[0].mxu0
    %v1033 = vadd.f32 %v761, %v1032
    %v1034 = vpop.f32.mrb[0].mxu0
    %v1035 = vadd.f32 %v761, %v1034
    %1036 = vmatprep.mubr.bf16.mxu0 0
    %1037 = vmatmul.mubr.bf16.gmra.mrb[0].mxu0 %v866
    %v1038 = vpop.f32.mrb[0].mxu0
    %v1039 = vadd.f32 %v766, %v1038
    %v1040 = vpop.f32.mrb[0].mxu0
    %v1041 = vadd.f32 %v766, %v1040
    %v1042 = vpop.f32.mrb[0].mxu0
    %v1043 = vadd.f32 %v771, %v1042
    %v1044 = vpop.f32.mrb[0].mxu0
    %v1045 = vadd.f32 %v771, %v1044
    %1046 = vmatprep.mubr.bf16.mxu0 0
    %1047 = vmatmul.mubr.bf16.gmra.mrb[0].mxu0 %v867
    %v1048 = vpop.f32.mrb[0].mxu0
    %v1049 = vadd.f32 %v776, %v1048
    %v1050 = vpop.f32.mrb[0].mxu0
    %v1051 = vadd.f32 %v776, %v1050
    %v1052 = vpop.f32.mrb[0].mxu0
    %v1053 = vadd.f32 %v781, %v1052
    %v1054 = vpop.f32.mrb[0].mxu0
    %v1055 = vadd.f32 %v781, %v1054
    %1056 = vmatprep.mubr.bf16.mxu0 0
    %1057 = vmatmul.mubr.bf16.gmra.mrb[0].mxu0 %v868
    %v1058 = vpop.f32.mrb[0].mxu0
    %v1059 = vadd.f32 %v786, %v1058
    %v1060 = vpop.f32.mrb[0].mxu0
    %v1061 = vadd.f32 %v786, %v1060
    %v1062 = vpop.f32.mrb[0].mxu0
    %v1063 = vadd.f32 %v791, %v1062
    %v1064 = vpop.f32.mrb[0].mxu0
    %v1065 = vadd.f32 %v791, %v1064
    %1066 = vmatprep.mubr.bf16.mxu0 0
    %1067 = vmatmul.mubr.bf16.gmra.mrb[0].mxu0 %v869
    %v1068 = vpop.f32.mrb[0].mxu0
    %v1069 = vadd.f32 %v796, %v1068
    %v1070 = vpop.f32.mrb[0].mxu0
    %v1071 = vadd.f32 %v796, %v1070
    %v1072 = vpop.f32.mrb[0].mxu0
    %v1073 = vadd.f32 %v801, %v1072
    %v1074 = vpop.f32.mrb[0].mxu0
    %v1075 = vadd.f32 %v801, %v1074
    %1076 = vmatprep.mubr.bf16.mxu0 0
    %1077 = vmatmul.mubr.bf16.gmra.mrb[0].mxu0 %v870
    %v1078 = vpop.f32.mrb[0].mxu0
    %v1079 = vadd.f32 %v806, %v1078
    %v1080 = vpop.f32.mrb[0].mxu0
    %v1081 = vadd.f32 %v806, %v1080
    %v1082 = vpop.f32.mrb[0].mxu0
    %v1083 = vadd.f32 %v811, %v1082
    %v1084 = vpop.f32.mrb[0].mxu0
    %v1085 = vadd.f32 %v811, %v1084
    %1086 = vmatprep.mubr.bf16.mxu0 0
    %1087 = vmatmul.mubr.bf16.gmra.mrb[0].mxu0 %v871
    %v1088 = vpop.f32.mrb[0].mxu0
    %v1089 = vadd.f32 %v816, %v1088
    %v1090 = vpop.f32.mrb[0].mxu0
    %v1091 = vadd.f32 %v816, %v1090
    %v1092 = vpop.f32.mrb[0].mxu0
    %v1093 = vadd.f32 %v821, %v1092
    %v1094 = vpop.f32.mrb[0].mxu0
    %v1095 = vadd.f32 %v821, %v1094
    %1096 = vmatprep.mubr.bf16.mxu0 0
    %1097 = vmatmul.mubr.bf16.gmra.mrb[0].mxu0 %v872
    %v1098 = vpop.f32.mrb[0].mxu0
    %v1099 = vadd.f32 %v826, %v1098
    %v1100 = vpop.f32.mrb[0].mxu0
    %v1101 = vadd.f32 %v826, %v1100
    %v1102 = vpop.f32.mrb[0].mxu0
    %v1103 = vadd.f32 %v831, %v1102
    %v1104 = vpop.f32.mrb[0].mxu0
    %v1105 = vadd.f32 %v831, %v1104
    %1106 = vdwg.mxu0
    %v1107 = vmax.f32 %v916, 0.0
    %v1108 = vmax.f32 %v918, 0.0
    %v1109 = vmax.f32 %v1029, 0.0
    %v1110 = vmax.f32 %v1031, 0.0
    %v1111 = vmax.f32 %v920, 0.0
    %v1112 = vmax.f32 %v922, 0.0
    %v1113 = vmax.f32 %v1033, 0.0
    %v1114 = vmax.f32 %v1035, 0.0
    %v1115 = vmax.f32 %v926, 0.0
    %v1116 = vmax.f32 %v928, 0.0
    %v1117 = vmax.f32 %v1039, 0.0
    %v1118 = vmax.f32 %v1041, 0.0
    %v1119 = vmax.f32 %v930, 0.0
    %v1120 = vmax.f32 %v932, 0.0
    %v1121 = vmax.f32 %v1043, 0.0
    %v1122 = vmax.f32 %v1045, 0.0
    %v1123 = vmax.f32 %v936, 0.0
    %v1124 = vmax.f32 %v938, 0.0
    %v1125 = vmax.f32 %v1049, 0.0
    %v1126 = vmax.f32 %v1051, 0.0
    %v1127 = vmax.f32 %v940, 0.0
    %v1128 = vmax.f32 %v942, 0.0
    %v1129 = vmax.f32 %v1053, 0.0
    %v1130 = vmax.f32 %v1055, 0.0
    %v1131 = vmax.f32 %v946, 0.0
    %v1132 = vmax.f32 %v948, 0.0
    %v1133 = vmax.f32 %v1059, 0.0
    %v1134 = vmax.f32 %v1061, 0.0
    %v1135 = vmax.f32 %v950, 0.0
    %v1136 = vmax.f32 %v952, 0.0
    %v1137 = vmax.f32 %v1063, 0.0
    %v1138 = vmax.f32 %v1065, 0.0
    %v1139 = vmax.f32 %v956, 0.0
    %v1140 = vmax.f32 %v958, 0.0
    %v1141 = vmax.f32 %v1069, 0.0
    %v1142 = vmax.f32 %v1071, 0.0
    %v1143 = vmax.f32 %v960, 0.0
    %v1144 = vmax.f32 %v962, 0.0
    %v1145 = vmax.f32 %v1073, 0.0
    %v1146 = vmax.f32 %v1075, 0.0
    %v1147 = vmax.f32 %v966, 0.0
    %v1148 = vmax.f32 %v968, 0.0
    %v1149 = vmax.f32 %v1079, 0.0
    %v1150 = vmax.f32 %v1081, 0.0
    %v1151 = vmax.f32 %v970, 0.0
    %v1152 = vmax.f32 %v972, 0.0
    %v1153 = vmax.f32 %v1083, 0.0
    %v1154 = vmax.f32 %v1085, 0.0
    %v1155 = vmax.f32 %v976, 0.0
    %v1156 = vmax.f32 %v978, 0.0
    %v1157 = vmax.f32 %v1089, 0.0
    %v1158 = vmax.f32 %v1091, 0.0
    %v1159 = vmax.f32 %v980, 0.0
    %v1160 = vmax.f32 %v982, 0.0
    %v1161 = vmax.f32 %v1093, 0.0
    %v1162 = vmax.f32 %v1095, 0.0
    %v1163 = vmax.f32 %v986, 0.0
    %v1164 = vmax.f32 %v988, 0.0
    %v1165 = vmax.f32 %v1099, 0.0
    %v1166 = vmax.f32 %v1101, 0.0
    %v1167 = vmax.f32 %v990, 0.0
    %v1168 = vmax.f32 %v992, 0.0
    %v1169 = vmax.f32 %v1103, 0.0
    %v1170 = vmax.f32 %v1105, 0.0
    %v1171 = vld [vmem:[%s5] sm:$0xff]
    %v1172 = vld [vmem:[%s5 + $0x8] sm:$0xff]
    %v1173 = vld [vmem:[%s5 + $0x10] sm:$0xff]
    %v1174 = vld [vmem:[%s5 + $0x18] sm:$0xff]
    %v1175 = vld [vmem:[%s5 + $0x20] sm:$0xff]
    %v1176 = vld [vmem:[%s5 + $0x28] sm:$0xff]
    %v1177 = vld [vmem:[%s5 + $0x30] sm:$0xff]
    %v1178 = vld [vmem:[%s5 + $0x38] sm:$0xff]
    %v1179 = vld [vmem:[%s5 + $0x40] sm:$0xff]
    %v1180 = vld [vmem:[%s5 + $0x48] sm:$0xff]
    %v1181 = vld [vmem:[%s5 + $0x50] sm:$0xff]
    %v1182 = vld [vmem:[%s5 + $0x58] sm:$0xff]
    %v1183 = vld [vmem:[%s5 + $0x60] sm:$0xff]
    %v1184 = vld [vmem:[%s5 + $0x68] sm:$0xff]
    %v1185 = vld [vmem:[%s5 + $0x70] sm:$0xff]
    %v1186 = vld [vmem:[%s5 + $0x78] sm:$0xff]
    %1188 = vset.pattern.permute.xlu0 0
    %1189 = vperm.xlu0 %1188, %v1171
    %v1190 = vpop.permute.xlu0 %1189
    %1193 = vset.pattern.permute.xlu0 0
    %1194 = vperm.xlu0 %1193, %v1172
    %v1195 = vpop.permute.xlu0 %1194
    %1198 = vset.pattern.permute.xlu0 0
    %1199 = vperm.xlu0 %1198, %v1173
    %v1200 = vpop.permute.xlu0 %1199
    %1203 = vset.pattern.permute.xlu0 0
    %1204 = vperm.xlu0 %1203, %v1174
    %v1205 = vpop.permute.xlu0 %1204
    %1208 = vset.pattern.permute.xlu0 0
    %1209 = vperm.xlu0 %1208, %v1175
    %v1210 = vpop.permute.xlu0 %1209
    %1213 = vset.pattern.permute.xlu0 0
    %1214 = vperm.xlu0 %1213, %v1176
    %v1215 = vpop.permute.xlu0 %1214
    %1218 = vset.pattern.permute.xlu0 0
    %1219 = vperm.xlu0 %1218, %v1177
    %v1220 = vpop.permute.xlu0 %1219
    %1223 = vset.pattern.permute.xlu0 0
    %1224 = vperm.xlu0 %1223, %v1178
    %v1225 = vpop.permute.xlu0 %1224
    %1228 = vset.pattern.permute.xlu0 0
    %1229 = vperm.xlu0 %1228, %v1179
    %v1230 = vpop.permute.xlu0 %1229
    %1233 = vset.pattern.permute.xlu0 0
    %1234 = vperm.xlu0 %1233, %v1180
    %v1235 = vpop.permute.xlu0 %1234
    %1238 = vset.pattern.permute.xlu0 0
    %1239 = vperm.xlu0 %1238, %v1181
    %v1240 = vpop.permute.xlu0 %1239
    %1243 = vset.pattern.permute.xlu0 0
    %1244 = vperm.xlu0 %1243, %v1182
    %v1245 = vpop.permute.xlu0 %1244
    %1248 = vset.pattern.permute.xlu0 0
    %1249 = vperm.xlu0 %1248, %v1183
    %v1250 = vpop.permute.xlu0 %1249
    %1253 = vset.pattern.permute.xlu0 0
    %1254 = vperm.xlu0 %1253, %v1184
    %v1255 = vpop.permute.xlu0 %1254
    %1258 = vset.pattern.permute.xlu0 0
    %1259 = vperm.xlu0 %1258, %v1185
    %v1260 = vpop.permute.xlu0 %1259
    %1263 = vset.pattern.permute.xlu0 0
    %1264 = vperm.xlu0 %1263, %v1186
    %v1265 = vpop.permute.xlu0 %1264
    %v1267 = vmul.f32 %v1107, %v1190
    %v1268 = vmul.f32 %v1108, %v1190
    %v1269 = vmul.f32 %v1109, %v1190
    %v1270 = vmul.f32 %v1110, %v1190
    %v1271 = vmul.f32 %v1111, %v1195
    %v1272 = vmul.f32 %v1112, %v1195
    %v1273 = vmul.f32 %v1113, %v1195
    %v1274 = vmul.f32 %v1114, %v1195
    %v1275 = vmul.f32 %v1115, %v1200
    %v1276 = vmul.f32 %v1116, %v1200
    %v1277 = vmul.f32 %v1117, %v1200
    %v1278 = vmul.f32 %v1118, %v1200
    %v1279 = vmul.f32 %v1119, %v1205
    %v1280 = vmul.f32 %v1120, %v1205
    %v1281 = vmul.f32 %v1121, %v1205
    %v1282 = vmul.f32 %v1122, %v1205
    %v1283 = vmul.f32 %v1123, %v1210
    %v1284 = vmul.f32 %v1124, %v1210
    %v1285 = vmul.f32 %v1125, %v1210
    %v1286 = vmul.f32 %v1126, %v1210
    %v1287 = vmul.f32 %v1127, %v1215
    %v1288 = vmul.f32 %v1128, %v1215
    %v1289 = vmul.f32 %v1129, %v1215
    %v1290 = vmul.f32 %v1130, %v1215
    %v1291 = vmul.f32 %v1131, %v1220
    %v1292 = vmul.f32 %v1132, %v1220
    %v1293 = vmul.f32 %v1133, %v1220
    %v1294 = vmul.f32 %v1134, %v1220
    %v1295 = vmul.f32 %v1135, %v1225
    %v1296 = vmul.f32 %v1136, %v1225
    %v1297 = vmul.f32 %v1137, %v1225
    %v1298 = vmul.f32 %v1138, %v1225
    %v1299 = vmul.f32 %v1139, %v1230
    %v1300 = vmul.f32 %v1140, %v1230
    %v1301 = vmul.f32 %v1141, %v1230
    %v1302 = vmul.f32 %v1142, %v1230
    %v1303 = vmul.f32 %v1143, %v1235
    %v1304 = vmul.f32 %v1144, %v1235
    %v1305 = vmul.f32 %v1145, %v1235
    %v1306 = vmul.f32 %v1146, %v1235
    %v1307 = vmul.f32 %v1147, %v1240
    %v1308 = vmul.f32 %v1148, %v1240
    %v1309 = vmul.f32 %v1149, %v1240
    %v1310 = vmul.f32 %v1150, %v1240
    %v1311 = vmul.f32 %v1151, %v1245
    %v1312 = vmul.f32 %v1152, %v1245
    %v1313 = vmul.f32 %v1153, %v1245
    %v1314 = vmul.f32 %v1154, %v1245
    %v1315 = vmul.f32 %v1155, %v1250
    %v1316 = vmul.f32 %v1156, %v1250
    %v1317 = vmul.f32 %v1157, %v1250
    %v1318 = vmul.f32 %v1158, %v1250
    %v1319 = vmul.f32 %v1159, %v1255
    %v1320 = vmul.f32 %v1160, %v1255
    %v1321 = vmul.f32 %v1161, %v1255
    %v1322 = vmul.f32 %v1162, %v1255
    %v1323 = vmul.f32 %v1163, %v1260
    %v1324 = vmul.f32 %v1164, %v1260
    %v1325 = vmul.f32 %v1165, %v1260
    %v1326 = vmul.f32 %v1166, %v1260
    %v1327 = vmul.f32 %v1167, %v1265
    %v1328 = vmul.f32 %v1168, %v1265
    %v1329 = vmul.f32 %v1169, %v1265
    %v1330 = vmul.f32 %v1170, %v1265
    %v1331 = vadd.f32 %v1267, %v1271
    %v1332 = vadd.f32 %v1331, %v1275
    %v1333 = vadd.f32 %v1332, %v1279
    %v1334 = vadd.f32 %v1333, %v1283
    %v1335 = vadd.f32 %v1334, %v1287
    %v1336 = vadd.f32 %v1335, %v1291
    %v1337 = vadd.f32 %v1336, %v1295
    %v1338 = vadd.f32 %v1337, %v1299
    %v1339 = vadd.f32 %v1338, %v1303
    %v1340 = vadd.f32 %v1339, %v1307
    %v1341 = vadd.f32 %v1340, %v1311
    %v1342 = vadd.f32 %v1341, %v1315
    %v1343 = vadd.f32 %v1342, %v1319
    %v1344 = vadd.f32 %v1343, %v1323
    %v1345 = vadd.f32 %v1344, %v1327
    %v1346 = vrot.slane %v1345, 4
    %v1347 = vadd.f32 %v1345, %v1346
    %v1348 = vrot.slane %v1347, 2
    %v1349 = vadd.f32 %v1347, %v1348
    %v1350 = vrot.slane %v1349, 1
    %v1351 = vadd.f32 %v1349, %v1350
    %v1352 = vadd.f32 %v1268, %v1272
    %v1353 = vadd.f32 %v1352, %v1276
    %v1354 = vadd.f32 %v1353, %v1280
    %v1355 = vadd.f32 %v1354, %v1284
    %v1356 = vadd.f32 %v1355, %v1288
    %v1357 = vadd.f32 %v1356, %v1292
    %v1358 = vadd.f32 %v1357, %v1296
    %v1359 = vadd.f32 %v1358, %v1300
    %v1360 = vadd.f32 %v1359, %v1304
    %v1361 = vadd.f32 %v1360, %v1308
    %v1362 = vadd.f32 %v1361, %v1312
    %v1363 = vadd.f32 %v1362, %v1316
    %v1364 = vadd.f32 %v1363, %v1320
    %v1365 = vadd.f32 %v1364, %v1324
    %v1366 = vadd.f32 %v1365, %v1328
    %v1367 = vrot.slane %v1366, 4
    %v1368 = vadd.f32 %v1366, %v1367
    %v1369 = vrot.slane %v1368, 2
    %v1370 = vadd.f32 %v1368, %v1369
    %v1371 = vrot.slane %v1370, 1
    %v1372 = vadd.f32 %v1370, %v1371
    %v1373 = vadd.f32 %v1269, %v1273
    %v1374 = vadd.f32 %v1373, %v1277
    %v1375 = vadd.f32 %v1374, %v1281
    %v1376 = vadd.f32 %v1375, %v1285
    %v1377 = vadd.f32 %v1376, %v1289
    %v1378 = vadd.f32 %v1377, %v1293
    %v1379 = vadd.f32 %v1378, %v1297
    %v1380 = vadd.f32 %v1379, %v1301
    %v1381 = vadd.f32 %v1380, %v1305
    %v1382 = vadd.f32 %v1381, %v1309
    %v1383 = vadd.f32 %v1382, %v1313
    %v1384 = vadd.f32 %v1383, %v1317
    %v1385 = vadd.f32 %v1384, %v1321
    %v1386 = vadd.f32 %v1385, %v1325
    %v1387 = vadd.f32 %v1386, %v1329
    %v1388 = vrot.slane %v1387, 4
    %v1389 = vadd.f32 %v1387, %v1388
    %v1390 = vrot.slane %v1389, 2
    %v1391 = vadd.f32 %v1389, %v1390
    %v1392 = vrot.slane %v1391, 1
    %v1393 = vadd.f32 %v1391, %v1392
    %v1394 = vadd.f32 %v1270, %v1274
    %v1395 = vadd.f32 %v1394, %v1278
    %v1396 = vadd.f32 %v1395, %v1282
    %v1397 = vadd.f32 %v1396, %v1286
    %v1398 = vadd.f32 %v1397, %v1290
    %v1399 = vadd.f32 %v1398, %v1294
    %v1400 = vadd.f32 %v1399, %v1298
    %v1401 = vadd.f32 %v1400, %v1302
    %v1402 = vadd.f32 %v1401, %v1306
    %v1403 = vadd.f32 %v1402, %v1310
    %v1404 = vadd.f32 %v1403, %v1314
    %v1405 = vadd.f32 %v1404, %v1318
    %v1406 = vadd.f32 %v1405, %v1322
    %v1407 = vadd.f32 %v1406, %v1326
    %v1408 = vadd.f32 %v1407, %v1330
    %v1409 = vrot.slane %v1408, 4
    %v1410 = vadd.f32 %v1408, %v1409
    %v1411 = vrot.slane %v1410, 2
    %v1412 = vadd.f32 %v1410, %v1411
    %v1413 = vrot.slane %v1412, 1
    %v1414 = vadd.f32 %v1412, %v1413
    %v1415 = vld [vmem:[#allocation2] sm:$0x1]
    %1417 = vset.pattern.permute.xlu0 0
    %1418 = vperm.xlu0 %1417, %v1415
    %v1419 = vpop.permute.xlu0 %1418
    %v1421 = vlaneseq
    %v1422 = vshrl.u32 %v1421, 7
    %v1423 = vsub.s32 0, %v1422
    %v1424 = vrot.slane %v1419, %v1423
    %v1425 = vadd.f32 %v1351, %v1424
    %v1426 = vadd.f32 %v1372, %v1424
    %v1427 = vadd.f32 %v1393, %v1424
    %v1428 = vadd.f32 %v1414, %v1424
    %v1429 = vmax.f32 %v1425, 0.0
    %v1430 = vmax.f32 %v1426, 0.0
    %v1431 = vmax.f32 %v1427, 0.0
    %v1432 = vmax.f32 %v1428, 0.0
    %v1437 = vcombine.low %v1429, %v1430
    %v1438 = vcombine.low %v1431, %v1432
    %v1440 = vunpack.c.l.s4 1966171168
    %v1441 = vunpack.c.0.s8 %v1440
    %v1442 = vlaneseq
    %v1443 = vshrl.u32 %v1442, 7
    %v1444 = vsub.s32 %v1441, %v1443
    %v1445 = vrot.slane %v1437, %v1444
    %v1447 = vunpack.c.l.s4 1966171168
    %v1448 = vunpack.c.0.s8 %v1447
    %v1449 = vlaneseq
    %v1450 = vshrl.u32 %v1449, 7
    %v1451 = vsub.s32 %v1448, %v1450
    %v1452 = vrot.slane %v1438, %v1451
    %v1453 = vcombine.low %v1445, %v1452
    %v1455 = vunpack.c.l.s4 1966171168
    %v1456 = vunpack.c.0.s8 %v1455
    %v1457 = vlaneseq
    %v1458 = vshrl.u32 %v1457, 7
    %v1459 = vsub.s32 %v1456, %v1458
    %v1460 = vrot.slane %v1453, %v1459
    %v1462 = vlaneseq
    %vm1463 = vcmp.ge.s32.totalorder %v1462, 0
    %vm1464 = vcmp.lt.s32.totalorder %v1462, 512
    %vm1465 = vmand %vm1463, %vm1464
    %1466 = vst.msk [vmem:[#allocation3] sm:$0xf] %vm1465, %v1460
    // Predicated region
    $region30: #{_mlp_forward_impl.1} parent=1 // pred_check
      _
    $region31: #{_mlp_forward_impl.1} parent=1 // pred_check_branch
      %1468 = sbr.rel (0) target = $region33
    $region32: #{_mlp_forward_impl.1} parent=1 // pred_region
      %s1470 = ssub.s32 64, 64
      %1471 = vsyncadd [#allocation4], %s1470
      %s1473 = sshll.u32 [#allocation3], 4
      %s1474 = int_to_ptr.vmem [resolvable:$true] %s1473
      %1476 = dma.vmem_to_hbm [thread:$0]  %s1474, 64, %s7, [#allocation4]
    $region33: #{_mlp_forward_impl.1} parent=1 // pred_fallthru
      _
    // Predicated region
    $region34: #{_mlp_forward_impl.1} parent=1 // pred_check
      _
    $region35: #{_mlp_forward_impl.1} parent=1 // pred_check_branch
      %1478 = sbr.rel (0) target = $region37
    $region36: #{_mlp_forward_impl.1} parent=1 // pred_region
      %1479 = dma.done [#allocation4], 64
    $region37: #{_mlp_forward_impl.1} parent=1 // pred_fallthru
      _
    %1480 = vsyncpa [#allocation4], 1

</llo_original>
